<compile_context>
chip_gen: v7x
topology: tpu7x:2x2x1
jax: 0.10.0
libtpu: 0.0.40
codegen_flags: <defaults>
</compile_context>

<pallas_src>
import jax
import jax.numpy as jnp
from jax.experimental import pallas as pl
from jax.experimental.pallas import tpu as pltpu


# ---------------------------------------------------------------------------
# Kernel
# ---------------------------------------------------------------------------
def _make_kernel(features, tf, mask_f):
    """Kernel over grid (batch_blocks, feature_blocks).

    x_ref: (TB, TF) native dtype   w_ref: (1, TF) f32   b_ref: (1,) SMEM f32
    o_ref: (1, TB)                 acc_ref: (1, TB) f32 VMEM scratch
    """

    def kernel(x_ref, w_ref, b_ref, o_ref, acc_ref):
        k = pl.program_id(1)

        @pl.when(k == 0)
        def _():
            acc_ref[...] = jnp.zeros_like(acc_ref)

        # Upcast in-kernel (free on v6e/v7x VPU; required on v5e which has no
        # bf16 VALU). x stays narrow on the HBM->VMEM stream.
        x = x_ref[...].astype(jnp.float32)
        w = w_ref[...].astype(jnp.float32)
        prod = x * w                                   # VPU, sublane-broadcast w

        if mask_f:
            # Final feature block is ragged: zero the garbage lanes so they do
            # not contaminate the accumulated dot product of valid rows.
            lane = jax.lax.broadcasted_iota(jnp.int32, prod.shape, 1)
            valid = jnp.minimum(features - k * tf, tf)
            prod = jnp.where(lane < valid, prod, 0.0)

        # Lane reduce (XLU) -> per-row sums, relaid out lane-dense as (1, TB).
        acc_ref[...] += jnp.sum(prod, axis=-1)[None, :]

        @pl.when(k == pl.num_programs(1) - 1)
        def _():
            z = acc_ref[...] + b_ref[0]
            # sigmoid on the lane-dense (1, TB) view; exp goes to the EUP.
            o_ref[...] = (1.0 / (1.0 + jnp.exp(-z))).astype(o_ref.dtype)

    return kernel


# ---------------------------------------------------------------------------
# Tiling heuristics
# ---------------------------------------------------------------------------
def _per_buffer_target_bytes():
    """Per x-buffer VMEM target by chip generation (x is double-buffered)."""
    try:
        kind = jax.devices()[0].device_kind.lower()
    except Exception:
        kind = ""
    if "v7" in kind:
        return 12 * 1024 * 1024   # 3.2 TB/s HBM: big tiles amortize 0.35us/step
    if "v6" in kind:
        return 8 * 1024 * 1024
    return 4 * 1024 * 1024        # v5e / unknown: modest tiles


def _sublane_align(dtype):
    bits = jnp.dtype(dtype).itemsize * 8
    return max(8, 256 // bits)    # f32 -> 8, bf16 -> 16, int8/fp8 -> 32


def _round_up(x, m):
    return ((x + m - 1) // m) * m


def _choose_tiles(batch, features, x_dtype):
    itemsize = jnp.dtype(x_dtype).itemsize
    align = _sublane_align(x_dtype)
    target = _per_buffer_target_bytes()
    f_pad = _round_up(features, 128)          # VMEM pads lanes to 128

    if f_pad * itemsize * align <= target:
        # Full feature dim per tile; row count from the byte budget (no row
        # floor that could blow the budget for large F).
        tf = features
        tb = max(align, (target // (f_pad * itemsize)) // align * align)
    else:
        # Very large F: split features over a second "arbitrary" grid axis.
        tb = 8 * align
        tf = max(128, (target // (tb * itemsize)) // 128 * 128)

    # Megacore (v7x): keep >=2 batch blocks when the batch allows it so the
    # "parallel" axis shards across both TensorCores; harmless on v5e/v6e.
    if batch >= 2 * align:
        tb = min(tb, _round_up(pl.cdiv(batch, 2), align))
    else:
        tb = min(tb, _round_up(batch, align))
    return max(tb, align), tf


def _vmem_limit_bytes(tb, tf, itemsize):
    tf_pad = _round_up(tf, 128)
    need = (2 * tb * tf_pad * itemsize    # double-buffered x tiles
            + 2 * 8 * tf_pad * 4          # weight blocks (sublane-padded)
            + 2 * 8 * tb * 4              # output blocks (sublane-padded)
            + 8 * tb * 4)                 # accumulator scratch
    return int(min(56 * 1024 * 1024, max(16 * 1024 * 1024, 2 * need)))


# ---------------------------------------------------------------------------
# Forward pass
# ---------------------------------------------------------------------------
def logistic_regression_forward(x, weight, bias):
    """sigmoid(x @ weight.T + bias).

    x: (B, F) float (any float dtype, streamed natively),
    weight: (1, F) (PyTorch nn.Linear layout), bias: (1,).
    Returns (B, 1) in x's float dtype.
    """
    x = jnp.asarray(x)
    B, F = x.shape
    out_dtype = x.dtype if jnp.issubdtype(x.dtype, jnp.floating) else jnp.float32
    weight = jnp.asarray(weight).reshape(1, F).astype(jnp.float32)   # tiny, lane-dense
    bias = jnp.asarray(bias).reshape(1).astype(jnp.float32)

    itemsize = jnp.dtype(x.dtype).itemsize
    TB, TF = _choose_tiles(B, F, x.dtype)
    nb = pl.cdiv(B, TB)                 # ragged last batch block is fine: rows are
    nf = pl.cdiv(F, TF)                 # independent, OOB output rows are dropped.
    mask_f = (nf > 1) and (F % TF != 0)

    kernel = _make_kernel(F, TF, mask_f)

    # TODO(synk): when F < 128 is a common production shape, pack 128//F logical
    # rows per vreg (segmented lane reduce) to stop lane-padding the x tile 4x.
    # TODO(synk): on v5e, sweep pipeline_mode=pl.Buffered(3) on the x spec if a
    # trace shows exposed per-step DMA latency.
    out = pl.pallas_call(
        kernel,
        out_shape=jax.ShapeDtypeStruct((nb, TB), out_dtype),
        grid_spec=pltpu.PrefetchScalarGridSpec(
            num_scalar_prefetch=0,
            grid=(nb, nf),
            in_specs=[
                pl.BlockSpec((TB, TF), lambda i, k: (i, k)),            # streamed x
                pl.BlockSpec((1, TF), lambda i, k: (0, k)),             # weight
                pl.BlockSpec(memory_space=pltpu.MemorySpace.SMEM),      # bias scalar
            ],
            out_specs=pl.BlockSpec((1, TB), lambda i, k: (i, 0)),       # lane-dense
            scratch_shapes=[pltpu.VMEM((1, TB), jnp.float32)],          # accumulator
        ),
        compiler_params=pltpu.CompilerParams(
            dimension_semantics=("parallel", "arbitrary"),
            vmem_limit_bytes=_vmem_limit_bytes(TB, TF, itemsize),
        ),
        cost_estimate=pl.CostEstimate(
            flops=2 * B * F,
            transcendentals=B,
            bytes_accessed=B * F * itemsize + F * 4
            + B * jnp.dtype(out_dtype).itemsize,
        ),
    )(x, weight, bias)

    # (nb, TB) row-major == flattened batch order; drop the ragged tail.
    return out.reshape(-1)[:B].reshape(B, 1)


if __name__ == "__main__":
    # Small, deterministic setup consistent with the module:
    # n_input_features = 32, batch = 8.
    B, F = 8, 32
    key = jax.random.PRNGKey(0)
    kx, kw, kb = jax.random.split(key, 3)

    x = jax.random.normal(kx, (B, F), dtype=jnp.float32)

    # Deterministic parameter init mirroring nn.Linear's default:
    # U(-1/sqrt(F), 1/sqrt(F)) for both weight (1, F) and bias (1,).
    bound = 1.0 / jnp.sqrt(jnp.float32(F))
    weight = jax.random.uniform(kw, (1, F), jnp.float32, -bound, bound)
    bias = jax.random.uniform(kb, (1,), jnp.float32, -bound, bound)

    y = logistic_regression_forward(x, weight, bias)
    y = jax.block_until_ready(y)

    # Reference check in plain JAX (same math outside the kernel).
    y_ref = jax.nn.sigmoid(x @ weight.T + bias)
    assert y.shape == (B, 1)
    assert jnp.allclose(y, y_ref, atol=1e-5, rtol=1e-5)

    print("KERNEL_OK")
</pallas_src>

<mosaic_0001>
module attributes {stable_mosaic.version = 11 : i64} {
  func.func @kernel(%arg0: i32, %arg1: i32, %arg2: memref<8x32xf32, #tpu.memory_space<vmem>>, %arg3: memref<1x32xf32, #tpu.memory_space<vmem>>, %arg4: memref<1xf32, #tpu.memory_space<smem>>, %arg5: memref<1x8xf32, #tpu.memory_space<vmem>>, %arg6: memref<1x8xf32, #tpu.memory_space<vmem>>) attributes {dimension_semantics = [#tpu.dimension_semantics<parallel>, #tpu.dimension_semantics<arbitrary>], iteration_bounds = array<i64: 1, 1>, scalar_prefetch = 0 : i64, scratch_operands = 1 : i64, tpu.core_type = #tpu.core_type<tc>, window_params = [{transform_indices = @transform_0, window_bounds = array<i64: 8, 32>}, {transform_indices = @transform_1, window_bounds = array<i64: 1, 32>}, {transform_indices = @transform_2, window_bounds = array<i64: 1>}, {transform_indices = @transform_3, window_bounds = array<i64: 1, 8>}]} {
    %c0_i32 = arith.constant 0 : i32
    %0 = arith.cmpi eq, %arg1, %c0_i32 : i32
    %1 = arith.extui %0 : i1 to i32
    %c0_i32_0 = arith.constant 0 : i32
    %2 = arith.cmpi ne, %1, %c0_i32_0 : i32
    scf.if %2 {
      %cst_10 = arith.constant 0.000000e+00 : f32
      %15 = vector.broadcast %cst_10 : f32 to vector<1x8xf32>
      %c0_11 = arith.constant 0 : index
      %c0_12 = arith.constant 0 : index
      %16 = vector.load %arg6[%c0_11, %c0_12] : memref<1x8xf32, #tpu.memory_space<vmem>>, vector<1x8xf32>
      tpu.vector_store %arg6[%c0_11, %c0_12], %15 {strides = array<i32>} : memref<1x8xf32, #tpu.memory_space<vmem>>, vector<1x8xf32>,
    } else {
    }
    %c0 = arith.constant 0 : index
    %c0_1 = arith.constant 0 : index
    %3 = vector.load %arg2[%c0, %c0_1] : memref<8x32xf32, #tpu.memory_space<vmem>>, vector<8x32xf32>
    %c0_2 = arith.constant 0 : index
    %c0_3 = arith.constant 0 : index
    %4 = vector.load %arg3[%c0_2, %c0_3] : memref<1x32xf32, #tpu.memory_space<vmem>>, vector<1x32xf32>
    %5 = vector.broadcast %4 : vector<1x32xf32> to vector<8x32xf32>
    %6 = arith.mulf %3, %5 : vector<8x32xf32>
    %c0_4 = arith.constant 0 : index
    %c0_5 = arith.constant 0 : index
    %7 = vector.load %arg6[%c0_4, %c0_5] : memref<1x8xf32, #tpu.memory_space<vmem>>, vector<1x8xf32>
    %cst = arith.constant dense<0.000000e+00> : vector<8xf32>
    %8 = vector.multi_reduction <add>, %6, %cst [1] : vector<8x32xf32> to vector<8xf32>
    %9 = vector.shape_cast %8 : vector<8xf32> to vector<1x8xf32>
    %10 = arith.addf %7, %9 : vector<1x8xf32>
    %c0_6 = arith.constant 0 : index
    %c0_7 = arith.constant 0 : index
    %11 = vector.load %arg6[%c0_6, %c0_7] : memref<1x8xf32, #tpu.memory_space<vmem>>, vector<1x8xf32>
    tpu.vector_store %arg6[%c0_6, %c0_7], %10 {strides = array<i32>} : memref<1x8xf32, #tpu.memory_space<vmem>>, vector<1x8xf32>,
    %c0_i32_8 = arith.constant 0 : i32
    %12 = arith.cmpi eq, %arg1, %c0_i32_8 : i32
    %13 = arith.extui %12 : i1 to i32
    %c0_i32_9 = arith.constant 0 : i32
    %14 = arith.cmpi ne, %13, %c0_i32_9 : i32
    scf.if %14 {
      %c0_10 = arith.constant 0 : index
      %c0_11 = arith.constant 0 : index
      %15 = vector.load %arg6[%c0_10, %c0_11] : memref<1x8xf32, #tpu.memory_space<vmem>>, vector<1x8xf32>
      %c0_12 = arith.constant 0 : index
      %16 = memref.load %arg4[%c0_12] : memref<1xf32, #tpu.memory_space<smem>>
      %17 = vector.broadcast %16 : f32 to vector<1x8xf32>
      %18 = arith.addf %15, %17 : vector<1x8xf32>
      %cst_13 = arith.constant 0.000000e+00 : f32
      %19 = vector.broadcast %cst_13 : f32 to vector<1x8xf32>
      %20 = arith.subf %19, %18 : vector<1x8xf32>
      %21 = math.exp %20 : vector<1x8xf32>
      %cst_14 = arith.constant 1.000000e+00 : f32
      %22 = vector.broadcast %cst_14 : f32 to vector<1x8xf32>
      %23 = arith.addf %22, %21 : vector<1x8xf32>
      %cst_15 = arith.constant 1.000000e+00 : f32
      %24 = vector.broadcast %cst_15 : f32 to vector<1x8xf32>
      %25 = arith.divf %24, %23 : vector<1x8xf32>
      %c0_16 = arith.constant 0 : index
      %c0_17 = arith.constant 0 : index
      %26 = vector.load %arg5[%c0_16, %c0_17] : memref<1x8xf32, #tpu.memory_space<vmem>>, vector<1x8xf32>
      tpu.vector_store %arg5[%c0_16, %c0_17], %25 {strides = array<i32>} : memref<1x8xf32, #tpu.memory_space<vmem>>, vector<1x8xf32>,
    } else {
    }
    return
  }
  func.func @transform_0(%arg0: i32, %arg1: i32) -> (i32, i32) {
    %c0_i32 = arith.constant 0 : i32
    return %arg0, %arg1 : i32, i32
  }
  func.func @transform_1(%arg0: i32, %arg1: i32) -> (i32, i32) {
    %c0_i32 = arith.constant 0 : i32
    %c0_i32_0 = arith.constant 0 : i32
    return %c0_i32, %arg1 : i32, i32
  }
  func.func @transform_2(%arg0: i32, %arg1: i32) -> i32 {
    %c0_i32 = arith.constant 0 : i32
    %c0_i32_0 = arith.constant 0 : i32
    return %c0_i32 : i32
  }
  func.func @transform_3(%arg0: i32, %arg1: i32) -> (i32, i32) {
    %c0_i32 = arith.constant 0 : i32
    %c0_i32_0 = arith.constant 0 : i32
    return %arg0, %c0_i32 : i32, i32
  }
}

</mosaic_0001>

<llo_original>
// kernel: tpu_custom_call.1
$region0: #{tpu_custom_call.1}
  #allocation0 [shape = 'u32[]', space=smem, size = 0x4, offset = 0x4, fixed_abs, tag = 'smem constant byte address 0x4 - core index']
  #allocation1 [shape = 'u32[144,128]{1,0:T(1,128)}', space=vmem, size = 0x12000, scoped, tag = 'internal scratch']
  #allocation2 [shape = 'f32[1,8]{1,0:T(1,128)}', space=vmem, size = 0x200, scoped, tag = 'scratch operand']
  #allocation3 [shape = 'f32[1]{0:T(128)S(6)}', space=smem, size = 0x200, scoped, tag = 'scoped memory for tpu_custom_call.1']
  %s0 = inlined_call_operand.hbm [shape: f32[8,32], index: 0, kind: input, shape index: {}]
  %s1 = inlined_call_operand.vmem [shape: f32[1,32], index: 1, kind: input, shape index: {}]
  %s2 = inlined_call_operand.<no memory space> [shape: f32[1], index: 2, kind: input, shape index: {}]
  %s3 = inlined_call_operand.hbm [shape: f32[1,8], index: 3, kind: output, shape index: {}]
  %s4 = sld [smem:[#allocation0]]
  $region34: #{tpu_custom_call.1} parent=0
    _
  %s6 = ssub.s32 1, %s4
  %s7 = scalar_select 0, %s6, %s4
  %8 = sst [smem:[#allocation3]] %s2
  $region1: #{tpu_custom_call.1} parent=0
    #allocation4 [shape = 'u8[4096]{0}', space=vmem, size = 0x1000, scoped, tag = 'input window, operand 0, single buffered']
    #allocation5 [shape = 's32[1]{0}', space=sflag, size = 0x4, scoped, tag = 'scoped memory for tpu_custom_call.1']
    #allocation6 [shape = 's32[1]{0}', space=sflag, size = 0x4, scoped, tag = 'scoped memory for tpu_custom_call.1']
    #allocation7 [shape = 'u8[512]{0}', space=vmem, size = 0x400, scoped, tag = 'output window, operand 0, single buffered']
    %9 = vsyncpa [#allocation5], 0
    %10 = vsyncpa [#allocation6], 0
    // Predicated region
    $region2: #{tpu_custom_call.1} parent=1 // pred_check
      _
    $region3: #{tpu_custom_call.1} parent=1 // pred_check_branch
      %12 = sbr.rel (0) target = $region5
    $region4: #{tpu_custom_call.1} parent=1 // pred_region
      %s14 = ssub.s32 128, 128
      %15 = vsyncadd [#allocation5], %s14
      %s17 = sshll.u32 [#allocation4], 4
      %s18 = int_to_ptr.vmem [resolvable:$true] %s17
      %20 = dma.hbm_to_vmem [thread:$0]  %s0, 128, %s18, [#allocation5]
    $region5: #{tpu_custom_call.1} parent=1 // pred_fallthru
      _
    // Predicated region
    $region6: #{tpu_custom_call.1} parent=1 // pred_check
      _
    $region7: #{tpu_custom_call.1} parent=1 // pred_check_branch
      %22 = sbr.rel (0) target = $region9
    $region8: #{tpu_custom_call.1} parent=1 // pred_region
      _
    $region9: #{tpu_custom_call.1} parent=1 // pred_fallthru
      _
    // Predicated region
    $region10: #{tpu_custom_call.1} parent=1 // pred_check
      _
    $region11: #{tpu_custom_call.1} parent=1 // pred_check_branch
      %24 = sbr.rel (0) target = $region13
    $region12: #{tpu_custom_call.1} parent=1 // pred_region
      _
    $region13: #{tpu_custom_call.1} parent=1 // pred_fallthru
      _
    // Predicated region
    $region14: #{tpu_custom_call.1} parent=1 // pred_check
      _
    $region15: #{tpu_custom_call.1} parent=1 // pred_check_branch
      %26 = sbr.rel (0) target = $region17
    $region16: #{tpu_custom_call.1} parent=1 // pred_region
      %27 = dma.done [#allocation5], 128
    $region17: #{tpu_custom_call.1} parent=1 // pred_fallthru
      _
    %p28 = scmp.eq.s32.totalorder 0, 0
    // Predicated region
    $region18: #{tpu_custom_call.1} parent=1 // pred_check
      %p29 = pneg %p28
    $region19: #{tpu_custom_call.1} parent=1 // pred_check_branch
      %31 = sbr.rel (%p29) target = $region21
    $region20: #{tpu_custom_call.1} parent=1 // pred_region
      %vm32 = vcmask 57344
      %33 = vst.msk [vmem:[#allocation2] sm:$0x1] %vm32, 0.0
    $region21: #{tpu_custom_call.1} parent=1 // pred_fallthru
      _
    %v34 = vld [vmem:[#allocation4] sm:$0xff]
    %v35 = vld [vmem:[%s1] sm:$0x1]
    %v37 = vlaneseq
    %v38 = vshrl.u32 %v37, 7
    %v39 = vsub.s32 0, %v38
    %v40 = vrot.slane %v35, %v39
    %v42 = vmul.f32 %v34, %v40
    %v43 = vld [vmem:[#allocation2] sm:$0x1]
    %vm44 = vcmask 261120
    %v45 = vsel %vm44, %v42, 0.0
    %46 = vadd.xlane.f32.xlu0 %v45
    %v47 = vpop.xlane.xlu0 %46
    %v49 = vlaneseq
    %v50 = vshrl.u32 %v49, 7
    %v51 = vsub.s32 0, %v50
    %v52 = vrot.slane %v47, %v51
    %v53 = vlaneseq
    %v54 = vshrl.u32 %v53, 7
    %v55 = vsub.s32 1, %v54
    %v56 = vrot.slane %v47, %v55
    %v57 = vlaneseq
    %v58 = vshrl.u32 %v57, 7
    %v59 = vsub.s32 2, %v58
    %v60 = vrot.slane %v47, %v59
    %v61 = vlaneseq
    %v62 = vshrl.u32 %v61, 7
    %v63 = vsub.s32 3, %v62
    %v64 = vrot.slane %v47, %v63
    %v65 = vlaneseq
    %v66 = vshrl.u32 %v65, 7
    %v67 = vsub.s32 4, %v66
    %v68 = vrot.slane %v47, %v67
    %v69 = vlaneseq
    %v70 = vshrl.u32 %v69, 7
    %v71 = vsub.s32 5, %v70
    %v72 = vrot.slane %v47, %v71
    %v73 = vlaneseq
    %v74 = vshrl.u32 %v73, 7
    %v75 = vsub.s32 6, %v74
    %v76 = vrot.slane %v47, %v75
    %v77 = vlaneseq
    %v78 = vshrl.u32 %v77, 7
    %v79 = vsub.s32 7, %v78
    %v80 = vrot.slane %v47, %v79
    %v81 = vcombine.low %v52, %v56
    %v82 = vcombine.low %v60, %v64
    %v83 = vcombine.low %v68, %v72
    %v84 = vcombine.low %v76, %v80
    %v86 = vunpack.c.l.s4 1966171168
    %v87 = vunpack.c.0.s8 %v86
    %v88 = vlaneseq
    %v89 = vshrl.u32 %v88, 7
    %v90 = vsub.s32 %v87, %v89
    %v91 = vrot.slane %v81, %v90
    %v93 = vunpack.c.l.s4 1966171168
    %v94 = vunpack.c.0.s8 %v93
    %v95 = vlaneseq
    %v96 = vshrl.u32 %v95, 7
    %v97 = vsub.s32 %v94, %v96
    %v98 = vrot.slane %v82, %v97
    %v100 = vunpack.c.l.s4 1966171168
    %v101 = vunpack.c.0.s8 %v100
    %v102 = vlaneseq
    %v103 = vshrl.u32 %v102, 7
    %v104 = vsub.s32 %v101, %v103
    %v105 = vrot.slane %v83, %v104
    %v107 = vunpack.c.l.s4 1966171168
    %v108 = vunpack.c.0.s8 %v107
    %v109 = vlaneseq
    %v110 = vshrl.u32 %v109, 7
    %v111 = vsub.s32 %v108, %v110
    %v112 = vrot.slane %v84, %v111
    %v113 = vcombine.low %v91, %v98
    %v114 = vcombine.low %v105, %v112
    %v116 = vunpack.c.l.s4 1966171168
    %v117 = vunpack.c.0.s8 %v116
    %v118 = vlaneseq
    %v119 = vshrl.u32 %v118, 7
    %v120 = vsub.s32 %v117, %v119
    %v121 = vrot.slane %v113, %v120
    %v123 = vunpack.c.l.s4 1966171168
    %v124 = vunpack.c.0.s8 %v123
    %v125 = vlaneseq
    %v126 = vshrl.u32 %v125, 7
    %v127 = vsub.s32 %v124, %v126
    %v128 = vrot.slane %v114, %v127
    %v129 = vcombine.low %v121, %v128
    %130 = vset.pattern.permute.xlu0 0
    %131 = vperm.xlu0 %130, %v129
    %v132 = vpop.permute.xlu0 %131
    %v133 = vlaneseq
    %v134 = vand.u32 %v133, 127
    %v135 = vlaneseq
    %v136 = vshrl.u32 %v135, 7
    %v137 = vsub.s32 %v134, %v136
    %v138 = vrot.slane %v132, %v137
    %v140 = vunpack.c.l.s4 1966171168
    %v141 = vunpack.c.0.s8 %v140
    %v142 = vlaneseq
    %v143 = vshrl.u32 %v142, 7
    %v144 = vsub.s32 %v141, %v143
    %v145 = vrot.slane %v138, %v144
    %v147 = vunpack.c.l.s4 1966171168
    %v148 = vunpack.c.0.s8 %v147
    %v149 = vlaneseq
    %v150 = vshrl.u32 %v149, 7
    %v151 = vsub.s32 %v148, %v150
    %v152 = vrot.slane %v145, %v151
    %v154 = vadd.f32 %v43, %v152
    %vm155 = vcmask 57344
    %156 = vst.msk [vmem:[#allocation2] sm:$0x1] %vm155, %v154
    // Predicated region
    $region22: #{tpu_custom_call.1} parent=1 // pred_check
      %p157 = pneg %p28
    $region23: #{tpu_custom_call.1} parent=1 // pred_check_branch
      %159 = sbr.rel (%p157) target = $region25
    $region24: #{tpu_custom_call.1} parent=1 // pred_region
      %v160 = vld [vmem:[#allocation2] sm:$0x1]
      %s161 = sld [smem:[#allocation3]]
      %v162 = vstv %s161
      %v163 = vadd.f32 %v160, %v162
      %v164 = vsub.f32 0.0, %v163
      %v165 = vmul.f32 %v164, 1.442695
      %v166 = vpow.pop %v165
      %v167 = vadd.f32 %v166, 1.0
      %v168 = vrcp.pop %v167
      %v169 = vmul.f32 1.0, %v168
      %170 = vst.msk [vmem:[#allocation7] sm:$0x1] %vm155, %v169
    $region25: #{tpu_custom_call.1} parent=1 // pred_fallthru
      _
    // Predicated region
    $region26: #{tpu_custom_call.1} parent=1 // pred_check
      _
    $region27: #{tpu_custom_call.1} parent=1 // pred_check_branch
      %172 = sbr.rel (0) target = $region29
    $region28: #{tpu_custom_call.1} parent=1 // pred_region
      %s174 = ssub.s32 16, 16
      %175 = vsyncadd [#allocation6], %s174
      %s177 = sshll.u32 [#allocation7], 4
      %s178 = int_to_ptr.vmem [resolvable:$true] %s177
      %180 = dma.vmem_to_hbm [thread:$0]  %s178, 16, %s3, [#allocation6]
    $region29: #{tpu_custom_call.1} parent=1 // pred_fallthru
      _
    // Predicated region
    $region30: #{tpu_custom_call.1} parent=1 // pred_check
      _
    $region31: #{tpu_custom_call.1} parent=1 // pred_check_branch
      %182 = sbr.rel (0) target = $region33
    $region32: #{tpu_custom_call.1} parent=1 // pred_region
      %183 = dma.done [#allocation6], 16
    $region33: #{tpu_custom_call.1} parent=1 // pred_fallthru
      _
    %184 = vsyncpa [#allocation5], 1
    %185 = vsyncpa [#allocation6], 1

</llo_original>
